<compile_context>
chip_gen: v7x
topology: tpu7x:2x2x1
jax: 0.10.0
libtpu: 0.0.40
codegen_flags: <defaults>
</compile_context>

<pallas_src>
import math
import jax
import jax.numpy as jnp
from jax.experimental import pallas as pl
from jax.experimental.pallas import tpu as pltpu


def readout_kernel(x_ref, w_ref, b_ref, o_ref):
    # x_ref: (TB, N, K) bf16, w_ref: (K, L) bf16, b_ref: (1, L) f32,
    # o_ref: (TB, L) f32
    TB, N, K = x_ref.shape
    L = w_ref.shape[1]

    x = x_ref[...].reshape(TB * N, K)                    # flatten batch*nodes into MXU M dim
    z = jnp.dot(x, w_ref[...],
                preferred_element_type=jnp.float32)      # (TB*N, L) f32 accumulate on MXU
    z = jnp.maximum(z + b_ref[...], 0.0)                 # relu(Z + bias) in f32
    s = jnp.sum(z.reshape(TB, N, L), axis=1)             # (TB, L) reduce over nodes in f32
    o_ref[...] = jax.nn.sigmoid(s).astype(o_ref.dtype)


def _round_up(v, m):
    return ((v + m - 1) // m) * m


def _choose_tb(B, N, K):
    # Target ~256 MXU rows per step (v6e/v7x MXU M dim), TB a multiple of 8
    # for a sublane-dense output block, but never pad far beyond the real
    # batch, and keep the double-buffered bf16 X tile under ~4 MiB.
    target = max(8, _round_up(pl.cdiv(256, N), 8))
    cap_batch = max(8, _round_up(B, 8))
    cap_vmem = max(8, (4 * 1024 * 1024) // max(1, 2 * 2 * N * K))
    cap_vmem = max(8, (cap_vmem // 8) * 8)
    return max(8, min(target, cap_batch, cap_vmem))


def readout_forward(x, weight, bias, *, tb=None):
    """x: (B, N, K) float32, weight: (K, L), bias: (L,) -> (B, L) float32."""
    B, N, K = x.shape
    K2, L = weight.shape
    assert K == K2

    if tb is None:
        tb = _choose_tb(B, N, K)
    B_pad = _round_up(B, tb)
    if B_pad != B:
        # Padded batch rows produce garbage outputs that are sliced off below;
        # each batch element's result is independent, so this is safe.
        x = jnp.pad(x, ((0, B_pad - B), (0, 0), (0, 0)))

    x_bf = x.astype(jnp.bfloat16)
    w_bf = weight.astype(jnp.bfloat16)
    bias2d = bias.reshape(1, L).astype(jnp.float32)

    out = pl.pallas_call(
        readout_kernel,
        out_shape=jax.ShapeDtypeStruct((B_pad, L), jnp.float32),
        grid_spec=pltpu.PrefetchScalarGridSpec(
            num_scalar_prefetch=0,
            grid=(B_pad // tb,),
            in_specs=[
                pl.BlockSpec((tb, N, K), lambda i: (i, 0, 0)),
                pl.BlockSpec((K, L), lambda i: (0, 0)),
                pl.BlockSpec((1, L), lambda i: (0, 0)),
            ],
            out_specs=pl.BlockSpec((tb, L), lambda i: (i, 0)),
        ),
        compiler_params=pltpu.CompilerParams(
            dimension_semantics=("parallel",)),
    )(x_bf, w_bf, bias2d)

    return out[:B]


def xavier_uniform(key, in_feature, out_feature, dtype=jnp.float32):
    bound = math.sqrt(6.0 / (in_feature + out_feature))
    return jax.random.uniform(key, (in_feature, out_feature),
                              minval=-bound, maxval=bound, dtype=dtype)


if __name__ == "__main__":
    # Small shapes consistent with the forward: X is (batch, nodes, in_feature).
    B, N, K, L = 2, 8, 32, 16

    key = jax.random.PRNGKey(0)
    kx, kw = jax.random.split(key)

    x = jax.random.normal(kx, (B, N, K), dtype=jnp.float32)
    weight = xavier_uniform(kw, K, L)            # deterministic init (xavier_uniform_)
    bias = jnp.zeros((L,), dtype=jnp.float32)    # zeros_ init

    out = readout_forward(x, weight, bias)
    out = jax.block_until_ready(out)

    # Reference check in plain JAX (f32); kernel uses bf16 matmul inputs with
    # f32 accumulation, so allow a small tolerance.
    z_ref = jnp.einsum('ijk,kl->ijl', x, weight)
    z_ref = jax.nn.relu(z_ref + bias)
    ref = jax.nn.sigmoid(jnp.sum(z_ref, axis=1))
    assert out.shape == (B, L)
    assert jnp.allclose(out, ref, atol=2e-2), "mismatch vs reference"

    print("KERNEL_OK")
</pallas_src>

<mosaic_0001>
module attributes {stable_mosaic.version = 11 : i64} {
  func.func @readout_kernel(%arg0: i32, %arg1: memref<8x8x32xbf16, #tpu.memory_space<vmem>>, %arg2: memref<32x16xbf16, #tpu.memory_space<vmem>>, %arg3: memref<1x16xf32, #tpu.memory_space<vmem>>, %arg4: memref<8x16xf32, #tpu.memory_space<vmem>>) attributes {dimension_semantics = [#tpu.dimension_semantics<parallel>], iteration_bounds = array<i64: 1>, scalar_prefetch = 0 : i64, scratch_operands = 0 : i64, tpu.core_type = #tpu.core_type<tc>, window_params = [{transform_indices = @transform_0, window_bounds = array<i64: 8, 8, 32>}, {pipeline_mode = #tpu.pipeline_mode<synchronous>, transform_indices = @transform_1, window_bounds = array<i64: 32, 16>}, {pipeline_mode = #tpu.pipeline_mode<synchronous>, transform_indices = @transform_2, window_bounds = array<i64: 1, 16>}, {transform_indices = @transform_3, window_bounds = array<i64: 8, 16>}]} {
    %c0 = arith.constant 0 : index
    %c0_0 = arith.constant 0 : index
    %c0_1 = arith.constant 0 : index
    %0 = vector.load %arg1[%c0, %c0_0, %c0_1] : memref<8x8x32xbf16, #tpu.memory_space<vmem>>, vector<8x8x32xbf16>
    %1 = vector.shape_cast %0 : vector<8x8x32xbf16> to vector<64x32xbf16>
    %c0_2 = arith.constant 0 : index
    %c0_3 = arith.constant 0 : index
    %2 = vector.load %arg2[%c0_2, %c0_3] : memref<32x16xbf16, #tpu.memory_space<vmem>>, vector<32x16xbf16>
    %cst = arith.constant dense<0.000000e+00> : vector<64x16xf32>
    %3 = tpu.matmul %1, %2, %cst {dimension_numbers = #tpu.dot_dimension_numbers<[1], [0], [0], [1], [0, 0, 1, 1], [], []>} : vector<64x32xbf16>, vector<32x16xbf16>, vector<64x16xf32> -> vector<64x16xf32>
    %c0_4 = arith.constant 0 : index
    %c0_5 = arith.constant 0 : index
    %4 = vector.load %arg3[%c0_4, %c0_5] : memref<1x16xf32, #tpu.memory_space<vmem>>, vector<1x16xf32>
    %5 = vector.broadcast %4 : vector<1x16xf32> to vector<64x16xf32>
    %6 = arith.addf %3, %5 : vector<64x16xf32>
    %cst_6 = arith.constant 0.000000e+00 : f32
    %7 = vector.broadcast %cst_6 : f32 to vector<64x16xf32>
    %8 = arith.maximumf %6, %7 : vector<64x16xf32>
    %9 = vector.shape_cast %8 : vector<64x16xf32> to vector<8x8x16xf32>
    %cst_7 = arith.constant dense<0.000000e+00> : vector<8x16xf32>
    %10 = vector.multi_reduction <add>, %9, %cst_7 [1] : vector<8x8x16xf32> to vector<8x16xf32>
    %11 = arith.negf %10 : vector<8x16xf32>
    %12 = math.exp %11 : vector<8x16xf32>
    %cst_8 = arith.constant 1.000000e+00 : f32
    %13 = vector.broadcast %cst_8 : f32 to vector<8x16xf32>
    %14 = arith.addf %13, %12 : vector<8x16xf32>
    %15 = arith.divf %13, %14 : vector<8x16xf32>
    %c0_9 = arith.constant 0 : index
    %c0_10 = arith.constant 0 : index
    %16 = vector.load %arg4[%c0_9, %c0_10] : memref<8x16xf32, #tpu.memory_space<vmem>>, vector<8x16xf32>
    tpu.vector_store %arg4[%c0_9, %c0_10], %15 {strides = array<i32>} : memref<8x16xf32, #tpu.memory_space<vmem>>, vector<8x16xf32>,
    return
  }
  func.func @transform_0(%arg0: i32) -> (i32, i32, i32) {
    %c0_i32 = arith.constant 0 : i32
    %c0_i32_0 = arith.constant 0 : i32
    %c0_i32_1 = arith.constant 0 : i32
    return %arg0, %c0_i32, %c0_i32_0 : i32, i32, i32
  }
  func.func @transform_1(%arg0: i32) -> (i32, i32) {
    %c0_i32 = arith.constant 0 : i32
    %c0_i32_0 = arith.constant 0 : i32
    %c0_i32_1 = arith.constant 0 : i32
    return %c0_i32, %c0_i32_0 : i32, i32
  }
  func.func @transform_2(%arg0: i32) -> (i32, i32) {
    %c0_i32 = arith.constant 0 : i32
    %c0_i32_0 = arith.constant 0 : i32
    %c0_i32_1 = arith.constant 0 : i32
    return %c0_i32, %c0_i32_0 : i32, i32
  }
  func.func @transform_3(%arg0: i32) -> (i32, i32) {
    %c0_i32 = arith.constant 0 : i32
    %c0_i32_0 = arith.constant 0 : i32
    return %arg0, %c0_i32 : i32, i32
  }
}

</mosaic_0001>

<llo_original>
// kernel: tpu_custom_call.1
$region0: #{tpu_custom_call.1}
  #allocation0 [shape = 'u32[]', space=smem, size = 0x4, offset = 0x4, fixed_abs, tag = 'smem constant byte address 0x4 - core index']
  #allocation1 [shape = 'u32[144,128]{1,0:T(1,128)}', space=vmem, size = 0x12000, scoped, tag = 'internal scratch']
  %s0 = inlined_call_operand.hbm [shape: bf16[8,8,32], index: 0, kind: input, shape index: {}]
  %s1 = inlined_call_operand.vmem [shape: bf16[32,16], index: 1, kind: input, shape index: {}]
  %s2 = inlined_call_operand.vmem [shape: f32[1,16], index: 2, kind: input, shape index: {}]
  %s3 = inlined_call_operand.hbm [shape: f32[8,16], index: 3, kind: output, shape index: {}]
  %s4 = sld [smem:[#allocation0]]
  $region26: #{tpu_custom_call.1} parent=0
    _
  %s6 = ssub.s32 1, %s4
  %s7 = scalar_select 0, %s6, %s4
  $region1: #{tpu_custom_call.1} parent=0
    #allocation2 [shape = 'u8[16384]{0}', space=vmem, size = 0x4000, scoped, tag = 'input window, operand 0, single buffered']
    #allocation3 [shape = 's32[1]{0}', space=sflag, size = 0x4, scoped, tag = 'scoped memory for tpu_custom_call.1']
    #allocation4 [shape = 's32[1]{0}', space=sflag, size = 0x4, scoped, tag = 'scoped memory for tpu_custom_call.1']
    #allocation5 [shape = 'u8[4096]{0}', space=vmem, size = 0x1000, scoped, tag = 'output window, operand 0, single buffered']
    %8 = vsyncpa [#allocation3], 0
    %9 = vsyncpa [#allocation4], 0
    // Predicated region
    $region2: #{tpu_custom_call.1} parent=1 // pred_check
      _
    $region3: #{tpu_custom_call.1} parent=1 // pred_check_branch
      %11 = sbr.rel (0) target = $region5
    $region4: #{tpu_custom_call.1} parent=1 // pred_region
      %s13 = ssub.s32 512, 512
      %14 = vsyncadd [#allocation3], %s13
      %s15 = sshll.u32 [#allocation2], 4
      %s16 = int_to_ptr.vmem [resolvable:$true] %s15
      %21 = dma.hbm_to_vmem [thread:$0]  %s0, 512, %s16, [#allocation3], 64, 64, 4
    $region5: #{tpu_custom_call.1} parent=1 // pred_fallthru
      _
    // Predicated region
    $region6: #{tpu_custom_call.1} parent=1 // pred_check
      _
    $region7: #{tpu_custom_call.1} parent=1 // pred_check_branch
      %23 = sbr.rel (0) target = $region9
    $region8: #{tpu_custom_call.1} parent=1 // pred_region
      _
    $region9: #{tpu_custom_call.1} parent=1 // pred_fallthru
      _
    // Predicated region
    $region10: #{tpu_custom_call.1} parent=1 // pred_check
      _
    $region11: #{tpu_custom_call.1} parent=1 // pred_check_branch
      %25 = sbr.rel (0) target = $region13
    $region12: #{tpu_custom_call.1} parent=1 // pred_region
      _
    $region13: #{tpu_custom_call.1} parent=1 // pred_fallthru
      _
    // Predicated region
    $region14: #{tpu_custom_call.1} parent=1 // pred_check
      _
    $region15: #{tpu_custom_call.1} parent=1 // pred_check_branch
      %27 = sbr.rel (0) target = $region17
    $region16: #{tpu_custom_call.1} parent=1 // pred_region
      %28 = dma.done [#allocation3], 512
    $region17: #{tpu_custom_call.1} parent=1 // pred_fallthru
      _
    %v30 = vld [vmem:[#allocation2] sm:$0xf]
    %v31 = vld [vmem:[#allocation2 + $0x4] sm:$0xf]
    %v32 = vld [vmem:[#allocation2 + $0x8] sm:$0xf]
    %v33 = vld [vmem:[#allocation2 + $0xc] sm:$0xf]
    %v34 = vld [vmem:[#allocation2 + $0x10] sm:$0xf]
    %v35 = vld [vmem:[#allocation2 + $0x14] sm:$0xf]
    %v36 = vld [vmem:[#allocation2 + $0x18] sm:$0xf]
    %v37 = vld [vmem:[#allocation2 + $0x1c] sm:$0xf]
    %v38 = vld [vmem:[%s1] sm:$0xf]
    %v39 = vld [vmem:[%s1 + $0x4] sm:$0xf]
    %v40 = vld [vmem:[%s1 + $0x8] sm:$0xf]
    %v41 = vld [vmem:[%s1 + $0xc] sm:$0xf]
    %v42 = vld [vmem:[%s2] sm:$0x1]
    %v44 = vlaneseq
    %v45 = vshrl.u32 %v44, 7
    %v46 = vsub.s32 0, %v45
    %v47 = vrot.slane %v42, %v46
    %v57 = vunpack.c.l.b16 %v30
    %v58 = vunpack.c.l.b16 %v31
    %v59 = vunpack.c.l.b16 %v32
    %v60 = vunpack.c.l.b16 %v33
    %v61 = vunpack.c.l.b16 %v34
    %v62 = vunpack.c.l.b16 %v35
    %v63 = vunpack.c.l.b16 %v36
    %v64 = vunpack.c.l.b16 %v37
    %v65 = vpack.c.b16 %v58, %v57
    %v66 = vpack.c.b16 %v60, %v59
    %v67 = vpack.c.b16 %v62, %v61
    %v68 = vpack.c.b16 %v64, %v63
    %v73 = vunpack.c.l.b16 %v38
    %v74 = vunpack.c.l.b16 %v39
    %v75 = vunpack.c.l.b16 %v40
    %v76 = vunpack.c.l.b16 %v41
    %v77 = vpack.c.b16 %v74, %v73
    %v78 = vpack.c.b16 %v76, %v75
    %vm81 = vcmask 261120
    %v83 = vsel %vm81, %v65, 0
    %v86 = vsel %vm81, %v66, 0
    %v89 = vsel %vm81, %v67, 0
    %v92 = vsel %vm81, %v68, 0
    %94 = vmatprep.subr.bf16.mxu0 0
    %95 = vmatpush1.bf16.msra.mxu0 %v77
    %96 = vmatprep.subr.bf16.mxu0 0
    %97 = vmatpush1.bf16.msra.mxu0 %v78
    %98 = vmatprep.subr.bf16.mxu0 0
    %99 = vmatpush1.bf16.msra.mxu0 0
    %100 = vmatprep.subr.bf16.mxu0 0
    %101 = vmatpush1.bf16.msra.mxu0 0
    %102 = vmatprep.subr.bf16.mxu0 0
    %103 = vmatpush1.bf16.msra.mxu0 0
    %104 = vmatprep.subr.bf16.mxu0 0
    %105 = vmatpush1.bf16.msra.mxu0 0
    %106 = vmatprep.subr.bf16.mxu0 0
    %107 = vmatpush1.bf16.msra.mxu0 0
    %108 = vmatprep.subr.bf16.mxu0 0
    %109 = vmatpush1.bf16.msra.mxu0 0
    %110 = vmatprep.subr.bf16.mxu0 0
    %111 = vmatpush1.bf16.msra.mxu0 0
    %112 = vmatprep.subr.bf16.mxu0 0
    %113 = vmatpush1.bf16.msra.mxu0 0
    %114 = vmatprep.subr.bf16.mxu0 0
    %115 = vmatpush1.bf16.msra.mxu0 0
    %116 = vmatprep.subr.bf16.mxu0 0
    %117 = vmatpush1.bf16.msra.mxu0 0
    %118 = vmatprep.subr.bf16.mxu0 0
    %119 = vmatpush1.bf16.msra.mxu0 0
    %120 = vmatprep.subr.bf16.mxu0 0
    %121 = vmatpush1.bf16.msra.mxu0 0
    %122 = vmatprep.subr.bf16.mxu0 0
    %123 = vmatpush1.bf16.msra.mxu0 0
    %124 = vmatprep.subr.bf16.mxu0 0
    %125 = vmatpush1.bf16.msra.mxu0 0
    %126 = vmatprep.mubr.bf16.mxu0 0
    %127 = vmatmul.mubr.bf16.gmra.mrb[0].mxu0 %v83
    %v128 = vpop.f32.mrb[0].mxu0
    %v129 = vadd.f32 %v47, %v128
    %v130 = vpop.f32.mrb[0].mxu0
    %v131 = vpop.f32.mrb[0].mxu0
    %v132 = vadd.f32 %v47, %v131
    %v133 = vpop.f32.mrb[0].mxu0
    %134 = vmatprep.mubr.bf16.mxu0 0
    %135 = vmatmul.mubr.bf16.gmra.mrb[0].mxu0 %v86
    %v136 = vpop.f32.mrb[0].mxu0
    %v137 = vadd.f32 %v47, %v136
    %v138 = vpop.f32.mrb[0].mxu0
    %v139 = vpop.f32.mrb[0].mxu0
    %v140 = vadd.f32 %v47, %v139
    %v141 = vpop.f32.mrb[0].mxu0
    %142 = vmatprep.mubr.bf16.mxu0 0
    %143 = vmatmul.mubr.bf16.gmra.mrb[0].mxu0 %v89
    %v144 = vpop.f32.mrb[0].mxu0
    %v145 = vadd.f32 %v47, %v144
    %v146 = vpop.f32.mrb[0].mxu0
    %v147 = vpop.f32.mrb[0].mxu0
    %v148 = vadd.f32 %v47, %v147
    %v149 = vpop.f32.mrb[0].mxu0
    %150 = vmatprep.mubr.bf16.mxu0 0
    %151 = vmatmul.mubr.bf16.gmra.mrb[0].mxu0 %v92
    %v152 = vpop.f32.mrb[0].mxu0
    %v153 = vadd.f32 %v47, %v152
    %v154 = vpop.f32.mrb[0].mxu0
    %v155 = vpop.f32.mrb[0].mxu0
    %v156 = vadd.f32 %v47, %v155
    %v157 = vpop.f32.mrb[0].mxu0
    %158 = vdwg.mxu0
    %v159 = vmax.f32 %v129, 0.0
    %v160 = vmax.f32 %v132, 0.0
    %v161 = vmax.f32 %v137, 0.0
    %v162 = vmax.f32 %v140, 0.0
    %v163 = vmax.f32 %v145, 0.0
    %v164 = vmax.f32 %v148, 0.0
    %v165 = vmax.f32 %v153, 0.0
    %v166 = vmax.f32 %v156, 0.0
    %vm167 = vcmask 130048
    %v168 = vsel %vm167, %v159, 0.0
    %v169 = vrot.slane %v168, 4
    %v170 = vadd.f32 %v168, %v169
    %v171 = vrot.slane %v170, 2
    %v172 = vadd.f32 %v170, %v171
    %v173 = vrot.slane %v172, 1
    %v174 = vadd.f32 %v172, %v173
    %v175 = vsel %vm167, %v160, 0.0
    %v176 = vrot.slane %v175, 4
    %v177 = vadd.f32 %v175, %v176
    %v178 = vrot.slane %v177, 2
    %v179 = vadd.f32 %v177, %v178
    %v180 = vrot.slane %v179, 1
    %v181 = vadd.f32 %v179, %v180
    %v182 = vsel %vm167, %v161, 0.0
    %v183 = vrot.slane %v182, 4
    %v184 = vadd.f32 %v182, %v183
    %v185 = vrot.slane %v184, 2
    %v186 = vadd.f32 %v184, %v185
    %v187 = vrot.slane %v186, 1
    %v188 = vadd.f32 %v186, %v187
    %v189 = vsel %vm167, %v162, 0.0
    %v190 = vrot.slane %v189, 4
    %v191 = vadd.f32 %v189, %v190
    %v192 = vrot.slane %v191, 2
    %v193 = vadd.f32 %v191, %v192
    %v194 = vrot.slane %v193, 1
    %v195 = vadd.f32 %v193, %v194
    %v196 = vsel %vm167, %v163, 0.0
    %v197 = vrot.slane %v196, 4
    %v198 = vadd.f32 %v196, %v197
    %v199 = vrot.slane %v198, 2
    %v200 = vadd.f32 %v198, %v199
    %v201 = vrot.slane %v200, 1
    %v202 = vadd.f32 %v200, %v201
    %v203 = vsel %vm167, %v164, 0.0
    %v204 = vrot.slane %v203, 4
    %v205 = vadd.f32 %v203, %v204
    %v206 = vrot.slane %v205, 2
    %v207 = vadd.f32 %v205, %v206
    %v208 = vrot.slane %v207, 1
    %v209 = vadd.f32 %v207, %v208
    %v210 = vsel %vm167, %v165, 0.0
    %v211 = vrot.slane %v210, 4
    %v212 = vadd.f32 %v210, %v211
    %v213 = vrot.slane %v212, 2
    %v214 = vadd.f32 %v212, %v213
    %v215 = vrot.slane %v214, 1
    %v216 = vadd.f32 %v214, %v215
    %v217 = vsel %vm167, %v166, 0.0
    %v218 = vrot.slane %v217, 4
    %v219 = vadd.f32 %v217, %v218
    %v220 = vrot.slane %v219, 2
    %v221 = vadd.f32 %v219, %v220
    %v222 = vrot.slane %v221, 1
    %v223 = vadd.f32 %v221, %v222
    %v224 = vxor.u32 %v174, 2147483648
    %v225 = vxor.u32 %v181, 2147483648
    %v226 = vxor.u32 %v188, 2147483648
    %v227 = vxor.u32 %v195, 2147483648
    %v228 = vxor.u32 %v202, 2147483648
    %v229 = vxor.u32 %v209, 2147483648
    %v230 = vxor.u32 %v216, 2147483648
    %v231 = vxor.u32 %v223, 2147483648
    %v232 = vmul.f32 %v224, 1.442695
    %v233 = vpow.pop %v232
    %v234 = vmul.f32 %v225, 1.442695
    %v235 = vpow.pop %v234
    %v236 = vmul.f32 %v226, 1.442695
    %v237 = vpow.pop %v236
    %v238 = vmul.f32 %v227, 1.442695
    %v239 = vpow.pop %v238
    %v240 = vmul.f32 %v228, 1.442695
    %v241 = vpow.pop %v240
    %v242 = vmul.f32 %v229, 1.442695
    %v243 = vpow.pop %v242
    %v244 = vmul.f32 %v230, 1.442695
    %v245 = vpow.pop %v244
    %v246 = vmul.f32 %v231, 1.442695
    %v247 = vpow.pop %v246
    %v248 = vadd.f32 %v233, 1.0
    %v249 = vadd.f32 %v235, 1.0
    %v250 = vadd.f32 %v237, 1.0
    %v251 = vadd.f32 %v239, 1.0
    %v252 = vadd.f32 %v241, 1.0
    %v253 = vadd.f32 %v243, 1.0
    %v254 = vadd.f32 %v245, 1.0
    %v255 = vadd.f32 %v247, 1.0
    %v256 = vrcp.pop %v248
    %v257 = vmul.f32 1.0, %v256
    %v258 = vrcp.pop %v249
    %v259 = vmul.f32 1.0, %v258
    %v260 = vrcp.pop %v250
    %v261 = vmul.f32 1.0, %v260
    %v262 = vrcp.pop %v251
    %v263 = vmul.f32 1.0, %v262
    %v264 = vrcp.pop %v252
    %v265 = vmul.f32 1.0, %v264
    %v266 = vrcp.pop %v253
    %v267 = vmul.f32 1.0, %v266
    %v268 = vrcp.pop %v254
    %v269 = vmul.f32 1.0, %v268
    %v270 = vrcp.pop %v255
    %v271 = vmul.f32 1.0, %v270
    %vm280 = vcmask 1041409
    %v281 = vsel %vm280, %v259, %v257
    %vm282 = vcmask 1042434
    %v283 = vsel %vm282, %v261, %v281
    %vm284 = vcmask 1043459
    %v285 = vsel %vm284, %v263, %v283
    %vm286 = vcmask 1044484
    %v287 = vsel %vm286, %v265, %v285
    %vm288 = vcmask 1045509
    %v289 = vsel %vm288, %v267, %v287
    %vm290 = vcmask 1046534
    %v291 = vsel %vm290, %v269, %v289
    %vm292 = vcmask 1047559
    %v293 = vsel %vm292, %v271, %v291
    %295 = vst.msk [vmem:[#allocation5] sm:$0xff] %vm167, %v293
    // Predicated region
    $region18: #{tpu_custom_call.1} parent=1 // pred_check
      _
    $region19: #{tpu_custom_call.1} parent=1 // pred_check_branch
      %297 = sbr.rel (0) target = $region21
    $region20: #{tpu_custom_call.1} parent=1 // pred_region
      %s299 = ssub.s32 128, 128
      %300 = vsyncadd [#allocation4], %s299
      %s302 = sshll.u32 [#allocation5], 4
      %s303 = int_to_ptr.vmem [resolvable:$true] %s302
      %305 = dma.vmem_to_hbm [thread:$0]  %s303, 128, %s3, [#allocation4]
    $region21: #{tpu_custom_call.1} parent=1 // pred_fallthru
      _
    // Predicated region
    $region22: #{tpu_custom_call.1} parent=1 // pred_check
      _
    $region23: #{tpu_custom_call.1} parent=1 // pred_check_branch
      %307 = sbr.rel (0) target = $region25
    $region24: #{tpu_custom_call.1} parent=1 // pred_region
      %308 = dma.done [#allocation4], 128
    $region25: #{tpu_custom_call.1} parent=1 // pred_fallthru
      _
    %309 = vsyncpa [#allocation3], 1
    %310 = vsyncpa [#allocation4], 1

</llo_original>
